<compile_context>
chip_gen: v6e
topology: v6e:2x2x1
jax: 0.10.0
libtpu: 0.0.40
codegen_flags: <defaults>
</compile_context>

<pallas_src>
import functools

import jax
import jax.numpy as jnp
from jax.experimental import pallas as pl
from jax.experimental.pallas import tpu as pltpu


# --------------------------------------------------------------------------------------
# Kernels
# --------------------------------------------------------------------------------------

def _smooth_l1(pred, target, beta):
    d = pred - target
    ad = jnp.abs(d)
    return jnp.where(ad < beta, (0.5 / beta) * (d * d), ad - 0.5 * beta)


def _ew_loss_kernel(pred_ref, dm_ref, loss_ref, *, beta, reduction):
    """dr == 1 path: pure elementwise smooth-L1 on lane-dense (tile_nc, tile_l) blocks."""
    pred = pred_ref[...].astype(jnp.float32)
    tgt = dm_ref[...].astype(jnp.float32)
    l = _smooth_l1(pred, tgt, beta)
    if reduction == 'none':
        loss_ref[...] = l.astype(loss_ref.dtype)
    else:
        # Per-lane partial sums (sublane reduce only); final cross-lane sum is in the wrapper.
        loss_ref[0, 0, :] = jnp.sum(l, axis=0)


def _pool_loss_kernel(pred_ref, dm_ref, bt_ref, loss_ref, *, dr, beta, reduction):
    """dr > 1 path: fused dr x dr sum-pool + smooth-L1 on (tile_nc, tile_ho, wo) blocks."""
    x = dm_ref[...].astype(jnp.float32)          # (tnc, tile_ho*dr, wc)
    tnc, th, wc = x.shape
    tho = th // dr
    # Row (sublane) pool: free leading-dim reshape + sum over the dr axis (VPU adds).
    rp = jnp.sum(x.reshape(tnc, tho, dr, wc), axis=2)          # (tnc, tho, wc)
    # Column (lane) pool: keep on the MXU (cross-lane sums on VPU/XLU are expensive).
    bt = bt_ref[...].astype(jnp.float32)                        # (wc, wo) 0/1 matrix
    pooled = jnp.dot(rp.reshape(tnc * tho, wc), bt,
                     preferred_element_type=jnp.float32)
    wo = pooled.shape[-1]
    pooled = pooled.reshape(tnc, tho, wo)

    pred = pred_ref[...].astype(jnp.float32)                    # (tnc, tho, wo)
    l = _smooth_l1(pred, pooled, beta)

    if reduction == 'none':
        # TODO(synk): for wo < 128 this store is lane-masked; a lane-dense (nc, ho*wo) output
        # would need an in-kernel sublane->lane relayout, which is not obviously cheaper.
        loss_ref[...] = l.astype(loss_ref.dtype)
    else:
        # Per-lane partial sums (no cross-lane XLU reduce in the inner loop).
        loss_ref[0, 0, :] = jnp.sum(l, axis=(0, 1))


# --------------------------------------------------------------------------------------
# Tile selection helpers (all divisor-based: no ragged tiles, no in-kernel masks)
# --------------------------------------------------------------------------------------

def _sublane_granule(*dtypes):
    g = 8
    for dt in dtypes:
        g = max(g, (8 * 4) // max(1, jnp.dtype(dt).itemsize))
    return g


def _largest_divisor_leq(x, cap):
    cap = max(1, min(x, int(cap)))
    for t in range(cap, 0, -1):
        if x % t == 0:
            return t
    return 1


def _pick_lane_tile(L, itemsize, target_bytes):
    """Lane tile for the flattened dr==1 path: full row, or a multiple-of-128 divisor of L."""
    if L * itemsize <= target_bytes:
        return L
    cap = max(128, ((target_bytes // max(1, itemsize)) // 128) * 128)
    for t in range(cap, 127, -128):
        if L % t == 0:
            return t
    return L                                    # fallback: whole row (still correct)


def _pick_nc_tile_2d(nc, row_bytes, target_bytes, granule):
    """Second-to-last block dim for 2D blocks: nc (full), a granule-multiple divisor, or 1."""
    cap = max(1, target_bytes // max(1, row_bytes))
    if nc <= cap:
        return nc
    best = 1
    t = granule
    while t <= min(nc, cap):
        if nc % t == 0:
            best = t
        t += granule
    return best


def _pick_ho_tile(ho, dr, wc, itemsize, target_bytes, granule):
    """Pooled-row tile: full ho, or a granule-multiple divisor of ho near the byte target."""
    row_bytes = max(1, dr * wc * itemsize)      # density-map bytes per pooled row (dominant)
    cap = max(1, target_bytes // row_bytes)
    if ho <= cap:
        return ho
    best = None
    t = granule
    while t <= cap:
        if ho % t == 0:
            best = t
        t += granule
    if best is not None:
        return best
    # TODO(synk): fallback keeps the whole H extent (no ragged tiles); a masked ragged-tile
    # path would bound VMEM for pathological (large prime) ho.
    return ho


# --------------------------------------------------------------------------------------
# Wrapper
# --------------------------------------------------------------------------------------

_VMEM_LIMIT = 32 * 1024 * 1024     # <= half of v7x physical VMEM; <= scoped default on v6e.


def smooth_l1_loss_pallas(outputs, density_map, *, downsampling_rate=1,
                          reduction='mean', beta=1.0,
                          _block_target_bytes=2 * 1024 * 1024):
    """Equivalent of SmoothL1Loss(reduction, downsampling_rate).forward(outputs, density_map)."""
    n, c, h, w = density_map.shape
    dr = int(downsampling_rate)
    ho, wo = h // dr, w // dr
    assert outputs.shape == (n, c, ho, wo), (outputs.shape, (n, c, ho, wo))
    nc = n * c

    out_dtypes = (outputs.dtype,) if reduction == 'none' else ()
    gran = _sublane_granule(outputs.dtype, density_map.dtype, *out_dtypes)
    itemsize = max(outputs.dtype.itemsize, density_map.dtype.itemsize)
    cparams = pltpu.CompilerParams(dimension_semantics=("parallel", "parallel"),
                                   vmem_limit_bytes=_VMEM_LIMIT)

    if dr == 1:
        # ---- pure elementwise path: flatten to (nc, ho*wo) so blocks are lane-dense ----
        L = ho * wo
        pred = outputs.reshape(nc, L)            # native dtype: cast happens in-kernel
        dm = density_map.reshape(nc, L)

        tile_l = _pick_lane_tile(L, itemsize, _block_target_bytes)
        rows_per_nc = tile_l * itemsize * (3 if reduction == 'none' else 2)
        tile_nc = _pick_nc_tile_2d(nc, rows_per_nc, _block_target_bytes, gran)
        n_nct, n_lt = nc // tile_nc, L // tile_l

        io_spec = pl.BlockSpec((tile_nc, tile_l), lambda i, j: (i, j))
        in_specs = [io_spec, io_spec]
        if reduction == 'none':
            out_shape = jax.ShapeDtypeStruct((nc, L), outputs.dtype)
            out_spec = io_spec
        else:
            out_shape = jax.ShapeDtypeStruct((n_nct, n_lt, tile_l), jnp.float32)
            out_spec = pl.BlockSpec((1, 1, tile_l), lambda i, j: (i, j, 0))

        kernel = functools.partial(_ew_loss_kernel, beta=float(beta), reduction=reduction)
        res = pl.pallas_call(
            kernel, out_shape=out_shape, grid=(n_nct, n_lt),
            in_specs=in_specs, out_specs=out_spec, compiler_params=cparams,
        )(pred, dm)

    else:
        # ---- fused dr x dr sum-pool + smooth-L1 path ----
        hc, wc = ho * dr, wo * dr
        pred = outputs.reshape(nc, ho, wo)
        dm = density_map.reshape(nc, h, w)[:, :hc, :wc]    # PyTorch conv floor-crop

        tile_ho = _pick_ho_tile(ho, dr, wc, density_map.dtype.itemsize,
                                _block_target_bytes, gran)
        tile_h = tile_ho * dr
        if tile_ho == ho:
            slice_bytes = (hc * wc * density_map.dtype.itemsize
                           + ho * wo * outputs.dtype.itemsize
                           * (2 if reduction == 'none' else 1))
            tile_nc = _largest_divisor_leq(nc, _block_target_bytes // max(1, slice_bytes))
        else:
            tile_nc = 1
        n_nct, n_ht = nc // tile_nc, ho // tile_ho

        # 0/1 lane(column)-pool matrix; bf16 is exact for 0/1 and halves its VMEM residency.
        col_ids = jnp.arange(wc) // dr
        bt = (col_ids[:, None] == jnp.arange(wo)[None, :]).astype(jnp.bfloat16)

        in_specs = [
            pl.BlockSpec((tile_nc, tile_ho, wo), lambda i, j: (i, j, 0)),   # predictions
            pl.BlockSpec((tile_nc, tile_h, wc), lambda i, j: (i, j, 0)),    # density map
            pl.BlockSpec((wc, wo), lambda i, j: (0, 0)),                    # pool matrix (const)
        ]
        if reduction == 'none':
            out_shape = jax.ShapeDtypeStruct((nc, ho, wo), outputs.dtype)
            out_spec = pl.BlockSpec((tile_nc, tile_ho, wo), lambda i, j: (i, j, 0))
        else:
            out_shape = jax.ShapeDtypeStruct((n_nct, n_ht, wo), jnp.float32)
            out_spec = pl.BlockSpec((1, 1, wo), lambda i, j: (i, j, 0))

        kernel = functools.partial(_pool_loss_kernel, dr=dr, beta=float(beta),
                                   reduction=reduction)
        res = pl.pallas_call(
            kernel, out_shape=out_shape, grid=(n_nct, n_ht),
            in_specs=in_specs, out_specs=out_spec, compiler_params=cparams,
        )(pred, dm, bt)

    if reduction == 'none':
        return res.reshape(n, c, ho, wo)
    total = jnp.sum(res)
    if reduction == 'mean':
        total = total / (nc * ho * wo)
    return total.astype(outputs.dtype)


# --------------------------------------------------------------------------------------
# Self-test
# --------------------------------------------------------------------------------------

if __name__ == "__main__":
    key = jax.random.PRNGKey(0)

    def ref_loss(outputs, dm, dr, reduction, beta=1.0):
        n, c, h, w = dm.shape
        ho, wo = h // dr, w // dr
        if dr > 1:
            pooled = dm[:, :, :ho * dr, :wo * dr].reshape(
                n, c, ho, dr, wo, dr).sum(axis=(3, 5))
        else:
            pooled = dm
        d = outputs - pooled
        ad = jnp.abs(d)
        l = jnp.where(ad < beta, 0.5 * d * d / beta, ad - 0.5 * beta)
        if reduction == 'mean':
            return jnp.mean(l)
        if reduction == 'sum':
            return jnp.sum(l)
        return l

    cases = [
        # (n, c, h,  w,   dr, reduction, forced_block_target_bytes)
        (2, 1, 16, 16,  2, 'mean', None),
        (2, 4, 16, 16,  1, 'mean', None),
        (2, 4, 16, 16,  1, 'none', None),
        (1, 1, 16, 16,  2, 'none', None),
        (2, 1, 32, 32,  4, 'sum',  None),
        (1, 1, 17, 19,  2, 'mean', None),        # non-divisible H/W -> conv floor-crop path
        (1, 1, 80, 128, 2, 'mean', 16 * 1024),   # forces H tiling (tile_ho=8, 5 H tiles)
        (1, 1, 80, 128, 2, 'none', 16 * 1024),   # tiled 'none' output path
    ]

    all_ok = True
    for idx, (n, c, h, w, dr, red, tgt) in enumerate(cases):
        key, k1, k2 = jax.random.split(key, 3)
        dm = jax.random.uniform(k1, (n, c, h, w), dtype=jnp.float32)
        # Scale predictions so both the quadratic (|d|<1) and linear (|d|>=1) branches are hit.
        out = jax.random.uniform(k2, (n, c, h // dr, w // dr), dtype=jnp.float32) * 4.0

        kwargs = dict(downsampling_rate=dr, reduction=red)
        if tgt is not None:
            kwargs['_block_target_bytes'] = tgt
        got = jax.block_until_ready(smooth_l1_loss_pallas(out, dm, **kwargs))
        want = ref_loss(out, dm, dr, red)
        if not bool(jnp.allclose(got, want, rtol=1e-5, atol=1e-4)):
            all_ok = False
            print(f"case {idx} mismatch: got={got} want={want}")

    if all_ok:
        print("KERNEL_OK")
</pallas_src>

<mosaic_0001>
module attributes {stable_mosaic.version = 11 : i64} {
  func.func @_pool_loss_kernel(%arg0: i32, %arg1: i32, %arg2: memref<2x8x8xf32, #tpu.memory_space<vmem>>, %arg3: memref<2x16x16xf32, #tpu.memory_space<vmem>>, %arg4: memref<16x8xbf16, #tpu.memory_space<vmem>>, %arg5: memref<1x1x8xf32, #tpu.memory_space<vmem>>) attributes {dimension_semantics = [#tpu.dimension_semantics<parallel>, #tpu.dimension_semantics<parallel>], iteration_bounds = array<i64: 1, 1>, scalar_prefetch = 0 : i64, scratch_operands = 0 : i64, tpu.core_type = #tpu.core_type<tc>, window_params = [{transform_indices = @transform_0, window_bounds = array<i64: 2, 8, 8>}, {transform_indices = @transform_1, window_bounds = array<i64: 2, 16, 16>}, {pipeline_mode = #tpu.pipeline_mode<synchronous>, transform_indices = @transform_2, window_bounds = array<i64: 16, 8>}, {transform_indices = @transform_3, window_bounds = array<i64: 1, 1, 8>}]} {
    %c0 = arith.constant 0 : index
    %c0_0 = arith.constant 0 : index
    %c0_1 = arith.constant 0 : index
    %0 = vector.load %arg3[%c0, %c0_0, %c0_1] : memref<2x16x16xf32, #tpu.memory_space<vmem>>, vector<2x16x16xf32>
    %1 = vector.shape_cast %0 : vector<2x16x16xf32> to vector<2x8x2x16xf32>
    %cst = arith.constant dense<0.000000e+00> : vector<2x8x16xf32>
    %2 = vector.multi_reduction <add>, %1, %cst [2] : vector<2x8x2x16xf32> to vector<2x8x16xf32>
    %c0_2 = arith.constant 0 : index
    %c0_3 = arith.constant 0 : index
    %3 = vector.load %arg4[%c0_2, %c0_3] : memref<16x8xbf16, #tpu.memory_space<vmem>>, vector<16x8xbf16>
    %4 = arith.extf %3 : vector<16x8xbf16> to vector<16x8xf32>
    %5 = vector.shape_cast %2 : vector<2x8x16xf32> to vector<16x16xf32>
    %cst_4 = arith.constant dense<0.000000e+00> : vector<16x8xf32>
    %6 = tpu.matmul %5, %4, %cst_4 {dimension_numbers = #tpu.dot_dimension_numbers<[1], [0], [0], [1], [0, 0, 1, 1], [], []>} : vector<16x16xf32>, vector<16x8xf32>, vector<16x8xf32> -> vector<16x8xf32>
    %7 = vector.shape_cast %6 : vector<16x8xf32> to vector<2x8x8xf32>
    %c0_5 = arith.constant 0 : index
    %c0_6 = arith.constant 0 : index
    %c0_7 = arith.constant 0 : index
    %8 = vector.load %arg2[%c0_5, %c0_6, %c0_7] : memref<2x8x8xf32, #tpu.memory_space<vmem>>, vector<2x8x8xf32>
    %9 = arith.subf %8, %7 : vector<2x8x8xf32>
    %10 = math.absf %9 : vector<2x8x8xf32>
    %cst_8 = arith.constant 1.000000e+00 : f32
    %11 = vector.broadcast %cst_8 : f32 to vector<2x8x8xf32>
    %12 = arith.cmpf olt, %10, %11 : vector<2x8x8xf32>
    %13 = arith.mulf %9, %9 : vector<2x8x8xf32>
    %cst_9 = arith.constant 5.000000e-01 : f32
    %14 = vector.broadcast %cst_9 : f32 to vector<2x8x8xf32>
    %15 = arith.mulf %14, %13 : vector<2x8x8xf32>
    %cst_10 = arith.constant 5.000000e-01 : f32
    %16 = vector.broadcast %cst_10 : f32 to vector<2x8x8xf32>
    %17 = arith.subf %10, %16 : vector<2x8x8xf32>
    %18 = arith.select %12, %15, %17 : vector<2x8x8xi1>, vector<2x8x8xf32>
    %cst_11 = arith.constant dense<0.000000e+00> : vector<8xf32>
    %19 = vector.multi_reduction <add>, %18, %cst_11 [0, 1] : vector<2x8x8xf32> to vector<8xf32>
    %c0_12 = arith.constant 0 : index
    %c0_13 = arith.constant 0 : index
    %c0_14 = arith.constant 0 : index
    %20 = vector.load %arg5[%c0_12, %c0_13, %c0_14] : memref<1x1x8xf32, #tpu.memory_space<vmem>>, vector<1x1x8xf32>
    %21 = vector.shape_cast %20 : vector<1x1x8xf32> to vector<8xf32>
    %22 = vector.shape_cast %19 : vector<8xf32> to vector<1x1x8xf32>
    tpu.vector_store %arg5[%c0_12, %c0_13, %c0_14], %22 {strides = array<i32>} : memref<1x1x8xf32, #tpu.memory_space<vmem>>, vector<1x1x8xf32>,
    return
  }
  func.func @transform_0(%arg0: i32, %arg1: i32) -> (i32, i32, i32) {
    %c0_i32 = arith.constant 0 : i32
    %c0_i32_0 = arith.constant 0 : i32
    return %arg0, %arg1, %c0_i32 : i32, i32, i32
  }
  func.func @transform_1(%arg0: i32, %arg1: i32) -> (i32, i32, i32) {
    %c0_i32 = arith.constant 0 : i32
    %c0_i32_0 = arith.constant 0 : i32
    return %arg0, %arg1, %c0_i32 : i32, i32, i32
  }
  func.func @transform_2(%arg0: i32, %arg1: i32) -> (i32, i32) {
    %c0_i32 = arith.constant 0 : i32
    %c0_i32_0 = arith.constant 0 : i32
    %c0_i32_1 = arith.constant 0 : i32
    return %c0_i32, %c0_i32_0 : i32, i32
  }
  func.func @transform_3(%arg0: i32, %arg1: i32) -> (i32, i32, i32) {
    %c0_i32 = arith.constant 0 : i32
    %c0_i32_0 = arith.constant 0 : i32
    return %arg0, %arg1, %c0_i32 : i32, i32, i32
  }
}

</mosaic_0001>

<llo_original>
// kernel: tpu_custom_call.1
$region0: #{tpu_custom_call.1}
  #allocation0 [shape = 'u32[]', space=smem, size = 0x4, offset = 0x4, fixed_abs, tag = 'smem constant byte address 0x4 - core index']
  #allocation1 [shape = 'u32[144,128]{1,0:T(1,128)}', space=vmem, size = 0x12000, scoped, tag = 'internal scratch']
  %s0 = inlined_call_operand.hbm [shape: f32[2,8,8], index: 0, kind: input, shape index: {}]
  %s1 = inlined_call_operand.hbm [shape: f32[2,16,16], index: 1, kind: input, shape index: {}]
  %s2 = inlined_call_operand.vmem [shape: bf16[16,8], index: 2, kind: input, shape index: {}]
  %s3 = inlined_call_operand.hbm [shape: f32[1,1,8], index: 3, kind: output, shape index: {}]
  %s4 = sld [smem:[#allocation0]]
  $region30: #{tpu_custom_call.1} parent=0
    _
  %s6 = ssub.s32 1, %s4
  %s7 = scalar_select 0, %s6, %s4
  $region1: #{tpu_custom_call.1} parent=0
    #allocation2 [shape = 'u8[8192]{0}', space=vmem, size = 0x2000, scoped, tag = 'input window, operand 0, single buffered']
    #allocation3 [shape = 's32[1]{0}', space=sflag, size = 0x4, scoped, tag = 'scoped memory for tpu_custom_call.1']
    #allocation4 [shape = 's32[1]{0}', space=sflag, size = 0x4, scoped, tag = 'scoped memory for tpu_custom_call.1']
    #allocation5 [shape = 'u8[16384]{0}', space=vmem, size = 0x4000, scoped, tag = 'input window, operand 1, single buffered']
    #allocation6 [shape = 's32[1]{0}', space=sflag, size = 0x4, scoped, tag = 'scoped memory for tpu_custom_call.1']
    #allocation7 [shape = 'u8[512]{0}', space=vmem, size = 0x400, scoped, tag = 'output window, operand 0, single buffered']
    %8 = vsyncpa [#allocation3], 0
    %9 = vsyncpa [#allocation6], 0
    %10 = vsyncpa [#allocation4], 0
    // Predicated region
    $region2: #{tpu_custom_call.1} parent=1 // pred_check
      _
    $region3: #{tpu_custom_call.1} parent=1 // pred_check_branch
      %12 = sbr.rel (0) target = $region5
    $region4: #{tpu_custom_call.1} parent=1 // pred_region
      %s14 = ssub.s32 256, 256
      %15 = vsyncadd [#allocation3], %s14
      %s16 = sshll.u32 [#allocation2], 4
      %s17 = int_to_ptr.vmem [resolvable:$true] %s16
      %22 = dma.hbm_to_vmem [thread:$0]  %s0, 256, %s17, [#allocation3], 128, 128, 8
    $region5: #{tpu_custom_call.1} parent=1 // pred_fallthru
      _
    // Predicated region
    $region6: #{tpu_custom_call.1} parent=1 // pred_check
      _
    $region7: #{tpu_custom_call.1} parent=1 // pred_check_branch
      %24 = sbr.rel (0) target = $region9
    $region8: #{tpu_custom_call.1} parent=1 // pred_region
      %s26 = ssub.s32 512, 512
      %27 = vsyncadd [#allocation6], %s26
      %s28 = sshll.u32 [#allocation5], 4
      %s29 = int_to_ptr.vmem [resolvable:$true] %s28
      %34 = dma.hbm_to_vmem [thread:$0]  %s1, 512, %s29, [#allocation6], 128, 128, 8
    $region9: #{tpu_custom_call.1} parent=1 // pred_fallthru
      _
    // Predicated region
    $region10: #{tpu_custom_call.1} parent=1 // pred_check
      _
    $region11: #{tpu_custom_call.1} parent=1 // pred_check_branch
      %36 = sbr.rel (0) target = $region13
    $region12: #{tpu_custom_call.1} parent=1 // pred_region
      _
    $region13: #{tpu_custom_call.1} parent=1 // pred_fallthru
      _
    // Predicated region
    $region14: #{tpu_custom_call.1} parent=1 // pred_check
      _
    $region15: #{tpu_custom_call.1} parent=1 // pred_check_branch
      %38 = sbr.rel (0) target = $region17
    $region16: #{tpu_custom_call.1} parent=1 // pred_region
      %39 = dma.done [#allocation3], 256
    $region17: #{tpu_custom_call.1} parent=1 // pred_fallthru
      _
    // Predicated region
    $region18: #{tpu_custom_call.1} parent=1 // pred_check
      _
    $region19: #{tpu_custom_call.1} parent=1 // pred_check_branch
      %41 = sbr.rel (0) target = $region21
    $region20: #{tpu_custom_call.1} parent=1 // pred_region
      %42 = dma.done [#allocation6], 512
    $region21: #{tpu_custom_call.1} parent=1 // pred_fallthru
      _
    %v43 = vld [vmem:[#allocation5] sm:$0xff]
    %v44 = vld [vmem:[#allocation5 + $0x8] sm:$0xff]
    %v45 = vld [vmem:[#allocation5 + $0x10] sm:$0xff]
    %v46 = vld [vmem:[#allocation5 + $0x18] sm:$0xff]
    %v51 = vcombine.high %v43, %v43
    %v53 = vunpack.c.l.s4 1983009808
    %v54 = vunpack.c.0.s8 %v53
    %v55 = vlaneseq
    %v56 = vshrl.u32 %v55, 7
    %v57 = vsub.s32 %v54, %v56
    %v58 = vrot.slane %v43, %v57
    %v60 = vunpack.c.l.s4 1983009808
    %v61 = vunpack.c.0.s8 %v60
    %v62 = vlaneseq
    %v63 = vshrl.u32 %v62, 7
    %v64 = vsub.s32 %v61, %v63
    %v65 = vrot.slane %v51, %v64
    %v66 = vcombine.high %v58, %v58
    %v67 = vcombine.high %v65, %v65
    %v68 = vcombine.high %v44, %v44
    %v70 = vunpack.c.l.s4 1983009808
    %v71 = vunpack.c.0.s8 %v70
    %v72 = vlaneseq
    %v73 = vshrl.u32 %v72, 7
    %v74 = vsub.s32 %v71, %v73
    %v75 = vrot.slane %v44, %v74
    %v77 = vunpack.c.l.s4 1983009808
    %v78 = vunpack.c.0.s8 %v77
    %v79 = vlaneseq
    %v80 = vshrl.u32 %v79, 7
    %v81 = vsub.s32 %v78, %v80
    %v82 = vrot.slane %v68, %v81
    %v83 = vcombine.high %v75, %v75
    %v84 = vcombine.high %v82, %v82
    %v85 = vcombine.high %v45, %v45
    %v87 = vunpack.c.l.s4 1983009808
    %v88 = vunpack.c.0.s8 %v87
    %v89 = vlaneseq
    %v90 = vshrl.u32 %v89, 7
    %v91 = vsub.s32 %v88, %v90
    %v92 = vrot.slane %v45, %v91
    %v94 = vunpack.c.l.s4 1983009808
    %v95 = vunpack.c.0.s8 %v94
    %v96 = vlaneseq
    %v97 = vshrl.u32 %v96, 7
    %v98 = vsub.s32 %v95, %v97
    %v99 = vrot.slane %v85, %v98
    %v100 = vcombine.high %v92, %v92
    %v101 = vcombine.high %v99, %v99
    %v102 = vcombine.high %v46, %v46
    %v104 = vunpack.c.l.s4 1983009808
    %v105 = vunpack.c.0.s8 %v104
    %v106 = vlaneseq
    %v107 = vshrl.u32 %v106, 7
    %v108 = vsub.s32 %v105, %v107
    %v109 = vrot.slane %v46, %v108
    %v111 = vunpack.c.l.s4 1983009808
    %v112 = vunpack.c.0.s8 %v111
    %v113 = vlaneseq
    %v114 = vshrl.u32 %v113, 7
    %v115 = vsub.s32 %v112, %v114
    %v116 = vrot.slane %v102, %v115
    %v117 = vcombine.high %v109, %v109
    %v118 = vcombine.high %v116, %v116
    %vm135 = vcmask 123904
    %v136 = vsel %vm135, %v58, 0.0
    %v137 = vrot.slane %v136, 4
    %v138 = vadd.f32 %v136, %v137
    %v139 = vrot.slane %v138, 2
    %v140 = vadd.f32 %v138, %v139
    %v141 = vrot.slane %v140, 1
    %v142 = vadd.f32 %v140, %v141
    %v143 = vsel %vm135, %v66, 0.0
    %v144 = vrot.slane %v143, 4
    %v145 = vadd.f32 %v143, %v144
    %v146 = vrot.slane %v145, 2
    %v147 = vadd.f32 %v145, %v146
    %v148 = vrot.slane %v147, 1
    %v149 = vadd.f32 %v147, %v148
    %v150 = vsel %vm135, %v65, 0.0
    %v151 = vrot.slane %v150, 4
    %v152 = vadd.f32 %v150, %v151
    %v153 = vrot.slane %v152, 2
    %v154 = vadd.f32 %v152, %v153
    %v155 = vrot.slane %v154, 1
    %v156 = vadd.f32 %v154, %v155
    %v157 = vsel %vm135, %v67, 0.0
    %v158 = vrot.slane %v157, 4
    %v159 = vadd.f32 %v157, %v158
    %v160 = vrot.slane %v159, 2
    %v161 = vadd.f32 %v159, %v160
    %v162 = vrot.slane %v161, 1
    %v163 = vadd.f32 %v161, %v162
    %v164 = vsel %vm135, %v75, 0.0
    %v165 = vrot.slane %v164, 4
    %v166 = vadd.f32 %v164, %v165
    %v167 = vrot.slane %v166, 2
    %v168 = vadd.f32 %v166, %v167
    %v169 = vrot.slane %v168, 1
    %v170 = vadd.f32 %v168, %v169
    %v171 = vsel %vm135, %v83, 0.0
    %v172 = vrot.slane %v171, 4
    %v173 = vadd.f32 %v171, %v172
    %v174 = vrot.slane %v173, 2
    %v175 = vadd.f32 %v173, %v174
    %v176 = vrot.slane %v175, 1
    %v177 = vadd.f32 %v175, %v176
    %v178 = vsel %vm135, %v82, 0.0
    %v179 = vrot.slane %v178, 4
    %v180 = vadd.f32 %v178, %v179
    %v181 = vrot.slane %v180, 2
    %v182 = vadd.f32 %v180, %v181
    %v183 = vrot.slane %v182, 1
    %v184 = vadd.f32 %v182, %v183
    %v185 = vsel %vm135, %v84, 0.0
    %v186 = vrot.slane %v185, 4
    %v187 = vadd.f32 %v185, %v186
    %v188 = vrot.slane %v187, 2
    %v189 = vadd.f32 %v187, %v188
    %v190 = vrot.slane %v189, 1
    %v191 = vadd.f32 %v189, %v190
    %v192 = vsel %vm135, %v92, 0.0
    %v193 = vrot.slane %v192, 4
    %v194 = vadd.f32 %v192, %v193
    %v195 = vrot.slane %v194, 2
    %v196 = vadd.f32 %v194, %v195
    %v197 = vrot.slane %v196, 1
    %v198 = vadd.f32 %v196, %v197
    %v199 = vsel %vm135, %v100, 0.0
    %v200 = vrot.slane %v199, 4
    %v201 = vadd.f32 %v199, %v200
    %v202 = vrot.slane %v201, 2
    %v203 = vadd.f32 %v201, %v202
    %v204 = vrot.slane %v203, 1
    %v205 = vadd.f32 %v203, %v204
    %v206 = vsel %vm135, %v99, 0.0
    %v207 = vrot.slane %v206, 4
    %v208 = vadd.f32 %v206, %v207
    %v209 = vrot.slane %v208, 2
    %v210 = vadd.f32 %v208, %v209
    %v211 = vrot.slane %v210, 1
    %v212 = vadd.f32 %v210, %v211
    %v213 = vsel %vm135, %v101, 0.0
    %v214 = vrot.slane %v213, 4
    %v215 = vadd.f32 %v213, %v214
    %v216 = vrot.slane %v215, 2
    %v217 = vadd.f32 %v215, %v216
    %v218 = vrot.slane %v217, 1
    %v219 = vadd.f32 %v217, %v218
    %v220 = vsel %vm135, %v109, 0.0
    %v221 = vrot.slane %v220, 4
    %v222 = vadd.f32 %v220, %v221
    %v223 = vrot.slane %v222, 2
    %v224 = vadd.f32 %v222, %v223
    %v225 = vrot.slane %v224, 1
    %v226 = vadd.f32 %v224, %v225
    %v227 = vsel %vm135, %v117, 0.0
    %v228 = vrot.slane %v227, 4
    %v229 = vadd.f32 %v227, %v228
    %v230 = vrot.slane %v229, 2
    %v231 = vadd.f32 %v229, %v230
    %v232 = vrot.slane %v231, 1
    %v233 = vadd.f32 %v231, %v232
    %v234 = vsel %vm135, %v116, 0.0
    %v235 = vrot.slane %v234, 4
    %v236 = vadd.f32 %v234, %v235
    %v237 = vrot.slane %v236, 2
    %v238 = vadd.f32 %v236, %v237
    %v239 = vrot.slane %v238, 1
    %v240 = vadd.f32 %v238, %v239
    %v241 = vsel %vm135, %v118, 0.0
    %v242 = vrot.slane %v241, 4
    %v243 = vadd.f32 %v241, %v242
    %v244 = vrot.slane %v243, 2
    %v245 = vadd.f32 %v243, %v244
    %v246 = vrot.slane %v245, 1
    %v247 = vadd.f32 %v245, %v246
    %v248 = vld [vmem:[%s2] sm:$0xf]
    %v249 = vld [vmem:[%s2 + $0x4] sm:$0xf]
    %v250 = vunpack.c.l.bf16 %v248
    %v251 = vunpack.c.l.bf16 %v249
    %vm268 = vcmask 1041409
    %v269 = vsel %vm268, %v149, %v142
    %vm270 = vcmask 1042434
    %v271 = vsel %vm270, %v156, %v269
    %vm272 = vcmask 1043459
    %v273 = vsel %vm272, %v163, %v271
    %vm274 = vcmask 1044484
    %v275 = vsel %vm274, %v170, %v273
    %vm276 = vcmask 1045509
    %v277 = vsel %vm276, %v177, %v275
    %vm278 = vcmask 1046534
    %v279 = vsel %vm278, %v184, %v277
    %vm280 = vcmask 1047559
    %v281 = vsel %vm280, %v191, %v279
    %v282 = vsel %vm268, %v205, %v198
    %v283 = vsel %vm270, %v212, %v282
    %v284 = vsel %vm272, %v219, %v283
    %v285 = vsel %vm274, %v226, %v284
    %v286 = vsel %vm276, %v233, %v285
    %v287 = vsel %vm278, %v240, %v286
    %v288 = vsel %vm280, %v247, %v287
    %vm289 = vcmask 130048
    %v290 = vsel %vm289, %v281, 0
    %v292 = vsel %vm289, %v288, 0
    %294 = vmatprep.subr.mxu0 0.0
    %295 = vmatpush1.msra.mxu0 0.0
    %296 = vmatprep.subr.mxu0 0.0
    %297 = vmatpush1.msra.mxu0 0.0
    %298 = vmatprep.subr.mxu0 0.0
    %299 = vmatpush1.msra.mxu0 0.0
    %300 = vmatprep.subr.mxu0 0.0
    %301 = vmatpush1.msra.mxu0 0.0
    %302 = vmatprep.subr.mxu0 0.0
    %303 = vmatpush1.msra.mxu0 0.0
    %304 = vmatprep.subr.mxu0 0.0
    %305 = vmatpush1.msra.mxu0 0.0
    %306 = vmatprep.subr.mxu0 0.0
    %307 = vmatpush1.msra.mxu0 0.0
    %308 = vmatprep.subr.mxu0 0.0
    %309 = vmatpush1.msra.mxu0 0.0
    %310 = vmatprep.subr.mxu0 0.0
    %311 = vmatpush1.msra.mxu0 0.0
    %312 = vmatprep.subr.mxu0 0.0
    %313 = vmatpush1.msra.mxu0 0.0
    %314 = vmatprep.subr.mxu0 0.0
    %315 = vmatpush1.msra.mxu0 0.0
    %316 = vmatprep.subr.mxu0 0.0
    %317 = vmatpush1.msra.mxu0 0.0
    %318 = vmatprep.subr.mxu0 0.0
    %319 = vmatpush1.msra.mxu0 0.0
    %320 = vmatprep.subr.mxu0 0.0
    %321 = vmatpush1.msra.mxu0 0.0
    %322 = vmatprep.subr.mxu0 0.0
    %323 = vmatpush1.msra.mxu0 %v251
    %324 = vmatprep.subr.mxu0 0.0
    %325 = vmatpush1.msra.mxu0 %v250
    %326 = vmatprep.subr.mxu0 0.0
    %327 = vmatpush2.msra.mxu0 0.0
    %328 = vmatprep.subr.mxu0 0.0
    %329 = vmatpush2.msra.mxu0 0.0
    %330 = vmatprep.subr.mxu0 0.0
    %331 = vmatpush2.msra.mxu0 0.0
    %332 = vmatprep.subr.mxu0 0.0
    %333 = vmatpush2.msra.mxu0 0.0
    %334 = vmatprep.subr.mxu0 0.0
    %335 = vmatpush2.msra.mxu0 0.0
    %336 = vmatprep.subr.mxu0 0.0
    %337 = vmatpush2.msra.mxu0 0.0
    %338 = vmatprep.subr.mxu0 0.0
    %339 = vmatpush2.msra.mxu0 0.0
    %340 = vmatprep.subr.mxu0 0.0
    %341 = vmatpush2.msra.mxu0 0.0
    %342 = vmatprep.subr.mxu0 0.0
    %343 = vmatpush2.msra.mxu0 0.0
    %344 = vmatprep.subr.mxu0 0.0
    %345 = vmatpush2.msra.mxu0 0.0
    %346 = vmatprep.subr.mxu0 0.0
    %347 = vmatpush2.msra.mxu0 0.0
    %348 = vmatprep.subr.mxu0 0.0
    %349 = vmatpush2.msra.mxu0 0.0
    %350 = vmatprep.subr.mxu0 0.0
    %351 = vmatpush2.msra.mxu0 0.0
    %352 = vmatprep.subr.mxu0 0.0
    %353 = vmatpush2.msra.mxu0 0.0
    %354 = vmatprep.subr.mxu0 0.0
    %355 = vmatpush2.msra.mxu0 0.0
    %356 = vmatprep.subr.mxu0 0.0
    %357 = vmatpush2.msra.mxu0 0.0
    %358 = vmatprep.mubr.f32.mxu0 0.0
    %359 = vmatmul.mubr.f32.gmra.mxu0 %v290
    %v360 = vpop.f32.mrf.mxu0
    %v361 = vadd.f32 0.0, %v360
    %v362 = vpop.f32.mrf.mxu0
    %363 = vmatprep.mubr.f32.mxu0 0.0
    %364 = vmatmul.mubr.f32.gmra.mxu0 %v292
    %v365 = vpop.f32.mrf.mxu0
    %v366 = vadd.f32 0.0, %v365
    %v367 = vpop.f32.mrf.mxu0
    %368 = vdwg.mxu0
    %v369 = vld [vmem:[#allocation2] sm:$0xff]
    %v370 = vld [vmem:[#allocation2 + $0x8] sm:$0xff]
    %v371 = vsub.f32 %v369, %v361
    %v372 = vsub.f32 %v370, %v366
    %v373 = vand.u32 2147483647, %v371
    %v374 = vand.u32 2147483647, %v372
    %vm375 = vcmp.lt.f32.partialorder %v373, 1.0
    %vm376 = vcmp.lt.f32.partialorder %v374, 1.0
    %v377 = vmul.f32 %v371, %v371
    %v378 = vmul.f32 %v372, %v372
    %v379 = vmul.f32 %v377, 0.5
    %v380 = vmul.f32 %v378, 0.5
    %v381 = vsub.f32 %v373, 0.5
    %v382 = vsub.f32 %v374, 0.5
    %v383 = vsel %vm375, %v379, %v381
    %v384 = vsel %vm376, %v380, %v382
    %vm385 = vcmask 64512
    %v386 = vsel %vm385, %v383, 0.0
    %v387 = vsel %vm385, %v384, 0.0
    %v388 = vadd.f32 %v386, %v387
    %v389 = vrot.slane %v388, 4
    %v390 = vadd.f32 %v388, %v389
    %v391 = vrot.slane %v390, 2
    %v392 = vadd.f32 %v390, %v391
    %v393 = vrot.slane %v392, 1
    %v394 = vadd.f32 %v392, %v393
    %vm395 = vcmask 57344
    %396 = vst.msk [vmem:[#allocation7] sm:$0x1] %vm395, %v394
    // Predicated region
    $region22: #{tpu_custom_call.1} parent=1 // pred_check
      _
    $region23: #{tpu_custom_call.1} parent=1 // pred_check_branch
      %398 = sbr.rel (0) target = $region25
    $region24: #{tpu_custom_call.1} parent=1 // pred_region
      %s400 = ssub.s32 16, 16
      %401 = vsyncadd [#allocation4], %s400
      %s403 = sshll.u32 [#allocation7], 4
      %s404 = int_to_ptr.vmem [resolvable:$true] %s403
      %406 = dma.vmem_to_hbm [thread:$0]  %s404, 16, %s3, [#allocation4]
    $region25: #{tpu_custom_call.1} parent=1 // pred_fallthru
      _
    // Predicated region
    $region26: #{tpu_custom_call.1} parent=1 // pred_check
      _
    $region27: #{tpu_custom_call.1} parent=1 // pred_check_branch
      %408 = sbr.rel (0) target = $region29
    $region28: #{tpu_custom_call.1} parent=1 // pred_region
      %409 = dma.done [#allocation4], 16
    $region29: #{tpu_custom_call.1} parent=1 // pred_fallthru
      _
    %410 = vsyncpa [#allocation3], 1
    %411 = vsyncpa [#allocation6], 1
    %412 = vsyncpa [#allocation4], 1

</llo_original>
